<compile_context>
chip_gen: v7x
topology: tpu7x:2x2x1
jax: 0.10.0
libtpu: 0.0.40
codegen_flags: <defaults>
</compile_context>

<pallas_src>
import functools

import jax
import jax.numpy as jnp
from jax.experimental import pallas as pl
from jax.experimental.pallas import tpu as pltpu


# --------------------------------------------------------------------------------------
# Helpers
# --------------------------------------------------------------------------------------
def _round_up(x, m):
    return (x + m - 1) // m * m


def _stable_softplus(x):
    # softplus(x) = max(x, 0) + log1p(exp(-|x|))  -- no overflow for large x
    return jnp.maximum(x, 0.0) + jnp.log1p(jnp.exp(-jnp.abs(x)))


def _pad2(a, rows, cols):
    r, c = a.shape
    if r == rows and c == cols:
        return a
    return jnp.pad(a, ((0, rows - r), (0, cols - c)))


def _vmem_budget_bytes():
    """Per-generation VMEM budget with ~25% headroom for Mosaic internals."""
    cap = 64 * 1024 * 1024  # conservative default (v7x per-TC)
    try:
        info = pltpu.get_tpu_info()
        c = getattr(info, "vmem_capacity_bytes", None)
        if c:
            cap = int(c)
    except Exception:
        pass
    return int(cap) * 3 // 4


def _choose_matmul_tiles(K, N_pad, n_w_streams, budget, *, tm, x_bytes, w_bytes,
                         out_bytes):
    """Pick (tm, tk, tn, K_pad) so double-buffered tiles fit the VMEM budget."""
    tn_cands = [t for t in (1024, 512, 256, 128) if N_pad % t == 0]

    def step_bytes(tk, tn):
        dbuf = 2  # double buffering
        return (dbuf * tm * tk * x_bytes                    # x tile
                + dbuf * n_w_streams * tk * tn * w_bytes    # weight(-related) tiles
                + dbuf * 8 * tn * 4                         # bias tile (sublane-padded)
                + dbuf * tm * tn * out_bytes                # output tile
                + tm * tn * 4)                              # f32 accumulator scratch

    # 1) Prefer an un-tiled K block: no K padding, and (with the j-outer grid) the
    #    weight stream is not revisited across batch tiles.
    for tn in tn_cands:
        if step_bytes(K, tn) <= budget:
            return tm, K, tn, K

    # 2) Tile K (bounds VMEM independently of F_in); pad K up to a multiple of 128.
    K_pad = _round_up(K, 128)
    tk_cands = [t for t in (4096, 2048, 1024, 512, 256, 128) if K_pad % t == 0]
    for tn in tn_cands:
        for tk in tk_cands:
            if step_bytes(tk, tn) <= budget:
                return tm, tk, tn, K_pad

    # 3) Fallback: minimum legal tiles.
    return tm, 128, 128, K_pad


# --------------------------------------------------------------------------------------
# Kernel 1: K-tiled matmul + bias epilogue.    Y = x @ W + b
#   grid = (N//tn, B//tm, K//tk); k is the reduction axis (innermost, "arbitrary").
# --------------------------------------------------------------------------------------
def _matmul_bias_kernel(x_ref, w_ref, b_ref, y_ref, acc_ref, *, compute_dtype):
    k = pl.program_id(2)

    @pl.when(k == 0)
    def _():
        acc_ref[...] = jnp.zeros_like(acc_ref)

    acc_ref[...] += jnp.dot(
        x_ref[...].astype(compute_dtype),
        w_ref[...].astype(compute_dtype),
        preferred_element_type=jnp.float32,
    )

    @pl.when(k == pl.num_programs(2) - 1)
    def _():
        y_ref[...] = (acc_ref[...] + b_ref[...].astype(jnp.float32)).astype(y_ref.dtype)


def _matmul_bias(x, w, b, tm, tk, tn, compute_dtype, out_dtype, vmem_limit):
    B_pad, K_pad = x.shape
    N_pad = w.shape[1]
    kernel = functools.partial(_matmul_bias_kernel, compute_dtype=compute_dtype)
    return pl.pallas_call(
        kernel,
        out_shape=jax.ShapeDtypeStruct((B_pad, N_pad), out_dtype),
        grid_spec=pltpu.PrefetchScalarGridSpec(
            num_scalar_prefetch=0,
            grid=(N_pad // tn, B_pad // tm, K_pad // tk),
            in_specs=[
                pl.BlockSpec((tm, tk), lambda j, i, k: (i, k)),   # x batch/K tile
                pl.BlockSpec((tk, tn), lambda j, i, k: (k, j)),   # weight K/N tile
                pl.BlockSpec((1, tn), lambda j, i, k: (0, j)),    # bias N tile
            ],
            out_specs=pl.BlockSpec((tm, tn), lambda j, i, k: (i, j)),
            scratch_shapes=[pltpu.VMEM((tm, tn), jnp.float32)],
        ),
        compiler_params=pltpu.CompilerParams(
            dimension_semantics=("parallel", "parallel", "arbitrary"),
            vmem_limit_bytes=vmem_limit,
        ),
    )(x, w, b)


# --------------------------------------------------------------------------------------
# Kernel 2: fused sampled matmul (small-batch sampling path).
#   W_tile = mu + softplus(rho)*eps computed in-register; no W ever hits HBM.
# --------------------------------------------------------------------------------------
def _fused_sampled_matmul_kernel(x_ref, wmu_ref, wrho_ref, weps_ref, b_ref,
                                 y_ref, acc_ref, *, compute_dtype):
    k = pl.program_id(2)

    @pl.when(k == 0)
    def _():
        acc_ref[...] = jnp.zeros_like(acc_ref)

    w = wmu_ref[...] + _stable_softplus(wrho_ref[...]) * weps_ref[...]
    acc_ref[...] += jnp.dot(
        x_ref[...].astype(compute_dtype),
        w.astype(compute_dtype),
        preferred_element_type=jnp.float32,
    )

    @pl.when(k == pl.num_programs(2) - 1)
    def _():
        y_ref[...] = (acc_ref[...] + b_ref[...].astype(jnp.float32)).astype(y_ref.dtype)


def _fused_sampled_matmul(x, w_mu, w_rho, w_eps, b, tm, tk, tn,
                          compute_dtype, out_dtype, vmem_limit):
    B_pad, K_pad = x.shape
    N_pad = w_mu.shape[1]
    kernel = functools.partial(_fused_sampled_matmul_kernel, compute_dtype=compute_dtype)
    w_spec = pl.BlockSpec((tk, tn), lambda j, i, k: (k, j))
    return pl.pallas_call(
        kernel,
        out_shape=jax.ShapeDtypeStruct((B_pad, N_pad), out_dtype),
        grid_spec=pltpu.PrefetchScalarGridSpec(
            num_scalar_prefetch=0,
            grid=(N_pad // tn, B_pad // tm, K_pad // tk),
            in_specs=[
                pl.BlockSpec((tm, tk), lambda j, i, k: (i, k)),   # x
                w_spec, w_spec, w_spec,                           # mu / rho / eps
                pl.BlockSpec((1, tn), lambda j, i, k: (0, j)),    # sampled bias
            ],
            out_specs=pl.BlockSpec((tm, tn), lambda j, i, k: (i, j)),
            scratch_shapes=[pltpu.VMEM((tm, tn), jnp.float32)],
        ),
        compiler_params=pltpu.CompilerParams(
            dimension_semantics=("parallel", "parallel", "arbitrary"),
            vmem_limit_bytes=vmem_limit,
        ),
    )(x, w_mu, w_rho, w_eps, b)


# --------------------------------------------------------------------------------------
# Kernel 3: weight reparameterization pre-pass (large-batch sampling path only).
#   Row- and column-tiled; emits W directly in the bf16 compute dtype.
# --------------------------------------------------------------------------------------
def _reparam_kernel(mu_ref, rho_ref, eps_ref, out_ref):
    out_ref[...] = (
        mu_ref[...] + _stable_softplus(rho_ref[...]) * eps_ref[...]
    ).astype(out_ref.dtype)


def _reparam(mu, rho, eps, out_dtype, budget):
    R, C = mu.shape
    ob = jnp.dtype(out_dtype).itemsize
    tn_cands = [t for t in (1024, 512, 256, 128) if C % t == 0]

    def step_bytes(rk, tn):
        return 2 * (3 * 4 + ob) * rk * tn  # 3 f32 inputs + 1 output, double-buffered

    rk, tn = None, None
    for tn_c in tn_cands:
        for rk_c in [R] + [r for r in (4096, 2048, 1024, 512, 256, 128)
                           if r < R and R % r == 0]:
            if step_bytes(rk_c, tn_c) <= budget:
                rk, tn = rk_c, tn_c
                break
        if rk is not None:
            break
    if rk is None:
        rk, tn = (8 if R % 8 == 0 else R), 128

    spec = pl.BlockSpec((rk, tn), lambda i, j: (i, j))
    return pl.pallas_call(
        _reparam_kernel,
        out_shape=jax.ShapeDtypeStruct((R, C), out_dtype),
        grid_spec=pltpu.PrefetchScalarGridSpec(
            num_scalar_prefetch=0,
            grid=(R // rk, C // tn),
            in_specs=[spec, spec, spec],
            out_specs=spec,
        ),
        compiler_params=pltpu.CompilerParams(
            dimension_semantics=("parallel", "parallel"),
            vmem_limit_bytes=budget,
        ),
    )(mu, rho, eps)


# --------------------------------------------------------------------------------------
# Wrapper: BayesLinear.forward
# --------------------------------------------------------------------------------------
def bayes_linear_forward(x, weight_mu, weight_rho, bias_mu, bias_rho,
                         eps_w=None, eps_b=None, *, sampling=False,
                         fuse_reparam=None, compute_dtype=jnp.bfloat16):
    """Pallas implementation of BayesLinear.forward.

    x:           (B, in_features)
    weight_*:    (in_features, out_features)
    bias_*:      (1, out_features)
    eps_w/eps_b: standard-normal noise of the weight/bias shapes (required iff sampling)
    """
    B, K = x.shape
    F_in, F_out = weight_mu.shape
    assert K == F_in, "x / weight_mu shape mismatch"
    out_dtype = x.dtype

    budget = _vmem_budget_bytes()
    N_pad = _round_up(F_out, 128)

    tm = min(_round_up(max(B, 1), 8), 256)
    B_pad = _round_up(B, tm)

    if fuse_reparam is None:
        fuse_reparam = (B_pad // tm) <= 2          # fused wins at <= ~2 batch tiles
    use_fused = bool(sampling) and bool(fuse_reparam)

    x_bytes = jnp.dtype(compute_dtype).itemsize
    if use_fused:
        n_w_streams, w_bytes = 3, 4                # mu / rho / eps in f32 per step
    elif sampling:
        n_w_streams, w_bytes = 1, x_bytes          # pre-sampled W already in bf16
    else:
        n_w_streams, w_bytes = 1, 4                # weight_mu in f32

    tm, tk, tn, K_pad = _choose_matmul_tiles(
        K, N_pad, n_w_streams, budget, tm=tm, x_bytes=x_bytes, w_bytes=w_bytes,
        out_bytes=jnp.dtype(out_dtype).itemsize)

    # Cast x once to the MXU compute dtype (bf16 halves its HBM traffic), then pad.
    x_p = _pad2(x.astype(compute_dtype), B_pad, K_pad)

    # NOTE: for repeated calls, pre-pad the parameters once at init (F_in / F_out
    # multiples of 128) to avoid these per-call copies; they are no-ops when shapes
    # are already aligned.
    w_mu_p = _pad2(weight_mu, K_pad, N_pad)

    if sampling:
        if eps_w is None or eps_b is None:
            raise ValueError("sampling=True requires eps_w and eps_b")
        # Bias reparameterization is a few-KB elementwise op: plain jnp, no kernel.
        b = _pad2(bias_mu + jax.nn.softplus(bias_rho) * eps_b, 1, N_pad)
        if use_fused:
            w_rho_p = _pad2(weight_rho, K_pad, N_pad)
            eps_w_p = _pad2(eps_w, K_pad, N_pad)
            y_p = _fused_sampled_matmul(x_p, w_mu_p, w_rho_p, eps_w_p, b,
                                        tm, tk, tn, compute_dtype, out_dtype, budget)
        else:
            # Large-batch path: hoisted reparameterization pre-pass emitting bf16 W.
            w = _reparam(w_mu_p, _pad2(weight_rho, K_pad, N_pad),
                         _pad2(eps_w, K_pad, N_pad), compute_dtype, budget)
            y_p = _matmul_bias(x_p, w, b, tm, tk, tn, compute_dtype, out_dtype, budget)
    else:
        b = _pad2(bias_mu, 1, N_pad)
        y_p = _matmul_bias(x_p, w_mu_p, b, tm, tk, tn, compute_dtype, out_dtype, budget)

    return y_p[:B, :F_out]


# --------------------------------------------------------------------------------------
# Self-test
# --------------------------------------------------------------------------------------
if __name__ == "__main__":
    key = jax.random.PRNGKey(0)
    k_x, k_wmu, k_bmu, k_wrho, k_brho, k_ew, k_eb = jax.random.split(key, 7)

    batch = 16
    in_features = 32
    out_features = 64

    x = jax.random.normal(k_x, (batch, in_features), dtype=jnp.float32)
    weight_mu = jax.random.uniform(k_wmu, (in_features, out_features),
                                   minval=-0.2, maxval=0.2, dtype=jnp.float32)
    bias_mu = jax.random.uniform(k_bmu, (1, out_features),
                                 minval=-0.2, maxval=0.2, dtype=jnp.float32)
    weight_rho = jax.random.uniform(k_wrho, (in_features, out_features),
                                    minval=-5.0, maxval=-4.0, dtype=jnp.float32)
    bias_rho = jax.random.uniform(k_brho, (1, out_features),
                                  minval=-5.0, maxval=-4.0, dtype=jnp.float32)
    eps_w = jax.random.normal(k_ew, (in_features, out_features), dtype=jnp.float32)
    eps_b = jax.random.normal(k_eb, (1, out_features), dtype=jnp.float32)

    # bf16 MXU operands => compare against the f32 reference with bf16-level tolerance.
    TOL = dict(atol=5e-2, rtol=5e-2)

    # --- eval path: Y = x @ weight_mu + bias_mu ---------------------------------------
    y_eval = bayes_linear_forward(x, weight_mu, weight_rho, bias_mu, bias_rho,
                                  sampling=False)
    y_eval = jax.block_until_ready(y_eval)
    ref_eval = x @ weight_mu + bias_mu
    assert y_eval.shape == ref_eval.shape
    assert jnp.allclose(y_eval, ref_eval, **TOL)

    # --- sampling path, fused reparam (small batch) ------------------------------------
    w_s = weight_mu + jax.nn.softplus(weight_rho) * eps_w
    b_s = bias_mu + jax.nn.softplus(bias_rho) * eps_b
    ref_samp = x @ w_s + b_s

    y_fused = bayes_linear_forward(x, weight_mu, weight_rho, bias_mu, bias_rho,
                                   eps_w, eps_b, sampling=True)
    y_fused = jax.block_until_ready(y_fused)
    assert y_fused.shape == ref_samp.shape
    assert jnp.allclose(y_fused, ref_samp, **TOL)

    # --- sampling path, hoisted pre-pass (large-batch code path, forced) ---------------
    y_prepass = bayes_linear_forward(x, weight_mu, weight_rho, bias_mu, bias_rho,
                                     eps_w, eps_b, sampling=True, fuse_reparam=False)
    y_prepass = jax.block_until_ready(y_prepass)
    assert y_prepass.shape == ref_samp.shape
    assert jnp.allclose(y_prepass, ref_samp, **TOL)

    print("KERNEL_OK")
</pallas_src>

<mosaic_0001>
module attributes {stable_mosaic.version = 11 : i64} {
  func.func @_matmul_bias_kernel(%arg0: i32, %arg1: i32, %arg2: i32, %arg3: memref<16x32xbf16, #tpu.memory_space<vmem>>, %arg4: memref<32x128xf32, #tpu.memory_space<vmem>>, %arg5: memref<1x128xf32, #tpu.memory_space<vmem>>, %arg6: memref<16x128xf32, #tpu.memory_space<vmem>>, %arg7: memref<16x128xf32, #tpu.memory_space<vmem>>) attributes {dimension_semantics = [#tpu.dimension_semantics<parallel>, #tpu.dimension_semantics<parallel>, #tpu.dimension_semantics<arbitrary>], iteration_bounds = array<i64: 1, 1, 1>, scalar_prefetch = 0 : i64, scratch_operands = 1 : i64, tpu.core_type = #tpu.core_type<tc>, window_params = [{transform_indices = @transform_0, window_bounds = array<i64: 16, 32>}, {transform_indices = @transform_1, window_bounds = array<i64: 32, 128>}, {transform_indices = @transform_2, window_bounds = array<i64: 1, 128>}, {transform_indices = @transform_3, window_bounds = array<i64: 16, 128>}]} {
    %c0_i32 = arith.constant 0 : i32
    %0 = arith.cmpi eq, %arg2, %c0_i32 : i32
    %1 = arith.extui %0 : i1 to i32
    %c0_i32_0 = arith.constant 0 : i32
    %2 = arith.cmpi ne, %1, %c0_i32_0 : i32
    scf.if %2 {
      %cst_10 = arith.constant 0.000000e+00 : f32
      %13 = vector.broadcast %cst_10 : f32 to vector<16x128xf32>
      %c0_11 = arith.constant 0 : index
      %c0_12 = arith.constant 0 : index
      %14 = vector.load %arg7[%c0_11, %c0_12] : memref<16x128xf32, #tpu.memory_space<vmem>>, vector<16x128xf32>
      tpu.vector_store %arg7[%c0_11, %c0_12], %13 {strides = array<i32>} : memref<16x128xf32, #tpu.memory_space<vmem>>, vector<16x128xf32>,
    } else {
    }
    %c0 = arith.constant 0 : index
    %c0_1 = arith.constant 0 : index
    %3 = vector.load %arg7[%c0, %c0_1] : memref<16x128xf32, #tpu.memory_space<vmem>>, vector<16x128xf32>
    %c0_2 = arith.constant 0 : index
    %c0_3 = arith.constant 0 : index
    %4 = vector.load %arg3[%c0_2, %c0_3] : memref<16x32xbf16, #tpu.memory_space<vmem>>, vector<16x32xbf16>
    %c0_4 = arith.constant 0 : index
    %c0_5 = arith.constant 0 : index
    %5 = vector.load %arg4[%c0_4, %c0_5] : memref<32x128xf32, #tpu.memory_space<vmem>>, vector<32x128xf32>
    %6 = arith.truncf %5 : vector<32x128xf32> to vector<32x128xbf16>
    %cst = arith.constant dense<0.000000e+00> : vector<16x128xf32>
    %7 = tpu.matmul %4, %6, %cst {dimension_numbers = #tpu.dot_dimension_numbers<[1], [0], [0], [1], [0, 0, 1, 1], [], []>} : vector<16x32xbf16>, vector<32x128xbf16>, vector<16x128xf32> -> vector<16x128xf32>
    %8 = arith.addf %3, %7 : vector<16x128xf32>
    %c0_6 = arith.constant 0 : index
    %c0_7 = arith.constant 0 : index
    %9 = vector.load %arg7[%c0_6, %c0_7] : memref<16x128xf32, #tpu.memory_space<vmem>>, vector<16x128xf32>
    tpu.vector_store %arg7[%c0_6, %c0_7], %8 {strides = array<i32>} : memref<16x128xf32, #tpu.memory_space<vmem>>, vector<16x128xf32>,
    %c0_i32_8 = arith.constant 0 : i32
    %10 = arith.cmpi eq, %arg2, %c0_i32_8 : i32
    %11 = arith.extui %10 : i1 to i32
    %c0_i32_9 = arith.constant 0 : i32
    %12 = arith.cmpi ne, %11, %c0_i32_9 : i32
    scf.if %12 {
      %c0_10 = arith.constant 0 : index
      %c0_11 = arith.constant 0 : index
      %13 = vector.load %arg7[%c0_10, %c0_11] : memref<16x128xf32, #tpu.memory_space<vmem>>, vector<16x128xf32>
      %c0_12 = arith.constant 0 : index
      %c0_13 = arith.constant 0 : index
      %14 = vector.load %arg5[%c0_12, %c0_13] : memref<1x128xf32, #tpu.memory_space<vmem>>, vector<1x128xf32>
      %15 = vector.broadcast %14 : vector<1x128xf32> to vector<16x128xf32>
      %16 = arith.addf %13, %15 : vector<16x128xf32>
      %c0_14 = arith.constant 0 : index
      %c0_15 = arith.constant 0 : index
      %17 = vector.load %arg6[%c0_14, %c0_15] : memref<16x128xf32, #tpu.memory_space<vmem>>, vector<16x128xf32>
      tpu.vector_store %arg6[%c0_14, %c0_15], %16 {strides = array<i32>} : memref<16x128xf32, #tpu.memory_space<vmem>>, vector<16x128xf32>,
    } else {
    }
    return
  }
  func.func @transform_0(%arg0: i32, %arg1: i32, %arg2: i32) -> (i32, i32) {
    %c0_i32 = arith.constant 0 : i32
    return %arg1, %arg2 : i32, i32
  }
  func.func @transform_1(%arg0: i32, %arg1: i32, %arg2: i32) -> (i32, i32) {
    %c0_i32 = arith.constant 0 : i32
    return %arg2, %arg0 : i32, i32
  }
  func.func @transform_2(%arg0: i32, %arg1: i32, %arg2: i32) -> (i32, i32) {
    %c0_i32 = arith.constant 0 : i32
    %c0_i32_0 = arith.constant 0 : i32
    return %c0_i32, %arg0 : i32, i32
  }
  func.func @transform_3(%arg0: i32, %arg1: i32, %arg2: i32) -> (i32, i32) {
    %c0_i32 = arith.constant 0 : i32
    return %arg1, %arg0 : i32, i32
  }
}

</mosaic_0001>

<llo_original>
// kernel: tpu_custom_call.1
$region0: #{tpu_custom_call.1}
  #allocation0 [shape = 'u32[]', space=smem, size = 0x4, offset = 0x4, fixed_abs, tag = 'smem constant byte address 0x4 - core index']
  #allocation1 [shape = 'u32[144,128]{1,0:T(1,128)}', space=vmem, size = 0x12000, scoped, tag = 'internal scratch']
  #allocation2 [shape = 'f32[16,128]{1,0:T(8,128)}', space=vmem, size = 0x2000, scoped, tag = 'scratch operand']
  %s0 = inlined_call_operand.hbm [shape: bf16[16,32], index: 0, kind: input, shape index: {}]
  %s1 = inlined_call_operand.hbm [shape: f32[32,128], index: 1, kind: input, shape index: {}]
  %s2 = inlined_call_operand.vmem [shape: f32[1,128], index: 2, kind: input, shape index: {}]
  %s3 = inlined_call_operand.hbm [shape: f32[16,128], index: 3, kind: output, shape index: {}]
  %s4 = sld [smem:[#allocation0]]
  $region38: #{tpu_custom_call.1} parent=0
    _
  %s6 = ssub.s32 1, %s4
  %s7 = scalar_select 0, %s6, %s4
  $region1: #{tpu_custom_call.1} parent=0
    #allocation3 [shape = 'u8[4096]{0}', space=vmem, size = 0x1000, scoped, tag = 'input window, operand 0, single buffered']
    #allocation4 [shape = 's32[1]{0}', space=sflag, size = 0x4, scoped, tag = 'scoped memory for tpu_custom_call.1']
    #allocation5 [shape = 's32[1]{0}', space=sflag, size = 0x4, scoped, tag = 'scoped memory for tpu_custom_call.1']
    #allocation6 [shape = 'u8[16384]{0}', space=vmem, size = 0x4000, scoped, tag = 'input window, operand 1, single buffered']
    #allocation7 [shape = 's32[1]{0}', space=sflag, size = 0x4, scoped, tag = 'scoped memory for tpu_custom_call.1']
    #allocation8 [shape = 'u8[8192]{0}', space=vmem, size = 0x2000, scoped, tag = 'output window, operand 0, single buffered']
    %8 = vsyncpa [#allocation4], 0
    %9 = vsyncpa [#allocation7], 0
    %10 = vsyncpa [#allocation5], 0
    // Predicated region
    $region2: #{tpu_custom_call.1} parent=1 // pred_check
      _
    $region3: #{tpu_custom_call.1} parent=1 // pred_check_branch
      %12 = sbr.rel (0) target = $region5
    $region4: #{tpu_custom_call.1} parent=1 // pred_region
      %s14 = ssub.s32 128, 128
      %15 = vsyncadd [#allocation4], %s14
      %s16 = sshll.u32 [#allocation3], 4
      %s17 = int_to_ptr.vmem [resolvable:$true] %s16
      %22 = dma.hbm_to_vmem [thread:$0]  %s0, 128, %s17, [#allocation4], 64, 64, 4
    $region5: #{tpu_custom_call.1} parent=1 // pred_fallthru
      _
    // Predicated region
    $region6: #{tpu_custom_call.1} parent=1 // pred_check
      _
    $region7: #{tpu_custom_call.1} parent=1 // pred_check_branch
      %24 = sbr.rel (0) target = $region9
    $region8: #{tpu_custom_call.1} parent=1 // pred_region
      %s26 = ssub.s32 512, 512
      %27 = vsyncadd [#allocation7], %s26
      %s28 = sshll.u32 [#allocation6], 4
      %s29 = int_to_ptr.vmem [resolvable:$true] %s28
      %34 = dma.hbm_to_vmem [thread:$0]  %s1, 512, %s29, [#allocation7], 128, 128, 8
    $region9: #{tpu_custom_call.1} parent=1 // pred_fallthru
      _
    // Predicated region
    $region10: #{tpu_custom_call.1} parent=1 // pred_check
      _
    $region11: #{tpu_custom_call.1} parent=1 // pred_check_branch
      %36 = sbr.rel (0) target = $region13
    $region12: #{tpu_custom_call.1} parent=1 // pred_region
      _
    $region13: #{tpu_custom_call.1} parent=1 // pred_fallthru
      _
    // Predicated region
    $region14: #{tpu_custom_call.1} parent=1 // pred_check
      _
    $region15: #{tpu_custom_call.1} parent=1 // pred_check_branch
      %38 = sbr.rel (0) target = $region17
    $region16: #{tpu_custom_call.1} parent=1 // pred_region
      %39 = dma.done [#allocation4], 128
    $region17: #{tpu_custom_call.1} parent=1 // pred_fallthru
      _
    // Predicated region
    $region18: #{tpu_custom_call.1} parent=1 // pred_check
      _
    $region19: #{tpu_custom_call.1} parent=1 // pred_check_branch
      %41 = sbr.rel (0) target = $region21
    $region20: #{tpu_custom_call.1} parent=1 // pred_region
      %42 = dma.done [#allocation7], 512
    $region21: #{tpu_custom_call.1} parent=1 // pred_fallthru
      _
    %p44 = scmp.eq.s32.totalorder 0, 0
    // Predicated region
    $region22: #{tpu_custom_call.1} parent=1 // pred_check
      %p45 = pneg %p44
    $region23: #{tpu_custom_call.1} parent=1 // pred_check_branch
      %47 = sbr.rel (%p45) target = $region25
    $region24: #{tpu_custom_call.1} parent=1 // pred_region
      %48 = vst [vmem:[#allocation2] sm:$0xff] 0.0
      %49 = vst [vmem:[#allocation2 + $0x8] sm:$0xff] 0.0
    $region25: #{tpu_custom_call.1} parent=1 // pred_fallthru
      _
    %v50 = vld [vmem:[#allocation2] sm:$0xff]
    %v51 = vld [vmem:[#allocation2 + $0x8] sm:$0xff]
    %v52 = vld [vmem:[#allocation3] sm:$0xf]
    %v53 = vld [vmem:[#allocation3 + $0x4] sm:$0xf]
    %v54 = vld [vmem:[#allocation6] sm:$0xff]
    %v55 = vld [vmem:[#allocation6 + $0x8] sm:$0xff]
    %v56 = vld [vmem:[#allocation6 + $0x10] sm:$0xff]
    %v57 = vld [vmem:[#allocation6 + $0x18] sm:$0xff]
    %v58 = vpack.c.bf16 %v55, %v54
    %v59 = vpack.c.bf16 %v57, %v56
    %v62 = vunpack.c.l.b16 %v52
    %v63 = vunpack.c.l.b16 %v53
    %v64 = vpack.c.b16 %v63, %v62
    %vm65 = vcmask 261120
    %v67 = vsel %vm65, %v64, 0
    %69 = vmatprep.subr.bf16.mxu0 0
    %70 = vmatpush1.bf16.msra.mxu0 %v58
    %71 = vmatprep.subr.bf16.mxu0 0
    %72 = vmatpush1.bf16.msra.mxu0 %v59
    %73 = vmatprep.subr.bf16.mxu0 0
    %74 = vmatpush1.bf16.msra.mxu0 0
    %75 = vmatprep.subr.bf16.mxu0 0
    %76 = vmatpush1.bf16.msra.mxu0 0
    %77 = vmatprep.subr.bf16.mxu0 0
    %78 = vmatpush1.bf16.msra.mxu0 0
    %79 = vmatprep.subr.bf16.mxu0 0
    %80 = vmatpush1.bf16.msra.mxu0 0
    %81 = vmatprep.subr.bf16.mxu0 0
    %82 = vmatpush1.bf16.msra.mxu0 0
    %83 = vmatprep.subr.bf16.mxu0 0
    %84 = vmatpush1.bf16.msra.mxu0 0
    %85 = vmatprep.subr.bf16.mxu0 0
    %86 = vmatpush1.bf16.msra.mxu0 0
    %87 = vmatprep.subr.bf16.mxu0 0
    %88 = vmatpush1.bf16.msra.mxu0 0
    %89 = vmatprep.subr.bf16.mxu0 0
    %90 = vmatpush1.bf16.msra.mxu0 0
    %91 = vmatprep.subr.bf16.mxu0 0
    %92 = vmatpush1.bf16.msra.mxu0 0
    %93 = vmatprep.subr.bf16.mxu0 0
    %94 = vmatpush1.bf16.msra.mxu0 0
    %95 = vmatprep.subr.bf16.mxu0 0
    %96 = vmatpush1.bf16.msra.mxu0 0
    %97 = vmatprep.subr.bf16.mxu0 0
    %98 = vmatpush1.bf16.msra.mxu0 0
    %99 = vmatprep.subr.bf16.mxu0 0
    %100 = vmatpush1.bf16.msra.mxu0 0
    %101 = vmatprep.mubr.bf16.mxu0 0
    %102 = vmatmul.mubr.bf16.gmra.mrb[0].mxu0 %v67
    %v103 = vpop.f32.mrb[0].mxu0
    %v104 = vadd.f32 0.0, %v103
    %v105 = vpop.f32.mrb[0].mxu0
    %v106 = vpop.f32.mrb[0].mxu0
    %v107 = vadd.f32 0.0, %v106
    %v108 = vpop.f32.mrb[0].mxu0
    %109 = vdwg.mxu0
    %v110 = vadd.f32 %v50, %v104
    %v111 = vadd.f32 %v51, %v107
    %112 = vst [vmem:[#allocation2] sm:$0xff] %v110
    %113 = vst [vmem:[#allocation2 + $0x8] sm:$0xff] %v111
    // Predicated region
    $region26: #{tpu_custom_call.1} parent=1 // pred_check
      %p114 = pneg %p44
    $region27: #{tpu_custom_call.1} parent=1 // pred_check_branch
      %116 = sbr.rel (%p114) target = $region29
    $region28: #{tpu_custom_call.1} parent=1 // pred_region
      %v117 = vld [vmem:[#allocation2] sm:$0xff]
      %v118 = vld [vmem:[#allocation2 + $0x8] sm:$0xff]
      %v119 = vld [vmem:[%s2] sm:$0x1]
      %v121 = vlaneseq
      %v122 = vshrl.u32 %v121, 7
      %v123 = vsub.s32 0, %v122
      %v124 = vrot.slane %v119, %v123
      %v126 = vadd.f32 %v117, %v124
      %v127 = vadd.f32 %v118, %v124
      %128 = vst [vmem:[#allocation8] sm:$0xff] %v126
      %129 = vst [vmem:[#allocation8 + $0x8] sm:$0xff] %v127
    $region29: #{tpu_custom_call.1} parent=1 // pred_fallthru
      _
    // Predicated region
    $region30: #{tpu_custom_call.1} parent=1 // pred_check
      _
    $region31: #{tpu_custom_call.1} parent=1 // pred_check_branch
      %131 = sbr.rel (0) target = $region33
    $region32: #{tpu_custom_call.1} parent=1 // pred_region
      %s133 = ssub.s32 256, 256
      %134 = vsyncadd [#allocation5], %s133
      %s135 = sshll.u32 [#allocation8], 4
      %s136 = int_to_ptr.vmem [resolvable:$true] %s135
      %141 = dma.vmem_to_hbm [thread:$0]  %s136, 256, %s3, [#allocation5], 128, 128, 8
    $region33: #{tpu_custom_call.1} parent=1 // pred_fallthru
      _
    // Predicated region
    $region34: #{tpu_custom_call.1} parent=1 // pred_check
      _
    $region35: #{tpu_custom_call.1} parent=1 // pred_check_branch
      %143 = sbr.rel (0) target = $region37
    $region36: #{tpu_custom_call.1} parent=1 // pred_region
      %144 = dma.done [#allocation5], 256
    $region37: #{tpu_custom_call.1} parent=1 // pred_fallthru
      _
    %145 = vsyncpa [#allocation4], 1
    %146 = vsyncpa [#allocation7], 1
    %147 = vsyncpa [#allocation5], 1

</llo_original>
